<compile_context>
chip_gen: v6e
topology: v6e:2x2x1
jax: 0.10.0
libtpu: 0.0.40
codegen_flags: <defaults>
</compile_context>

<pallas_src>
import functools

import jax
import jax.numpy as jnp
import numpy as np
from jax.experimental import pallas as pl
from jax.experimental.pallas import tpu as pltpu


OUT_SIZE = 3
OUT_FLAT = OUT_SIZE * OUT_SIZE  # 9


def _pool_matrix(in_size: int, out_size: int) -> np.ndarray:
    """Averaging matrix P (out_size, in_size): P[i, k] = 1/bin_len if k in bin i."""
    mat = np.zeros((out_size, in_size), dtype=np.float32)
    for i in range(out_size):
        start = (i * in_size) // out_size
        end = -(-((i + 1) * in_size) // out_size)  # ceil
        mat[i, start:end] = 1.0 / float(end - start)
    return mat


def _kron_pool_matrix(h: int, w: int) -> np.ndarray:
    """(H*W, 9) Kronecker pooling matrix: out[b, i*3+j] = sum_hw x[b, h*W+w] * P[h*W+w, i*3+j]."""
    ph = _pool_matrix(h, OUT_SIZE)  # (3, H)
    pw = _pool_matrix(w, OUT_SIZE)  # (3, W)
    return np.kron(ph, pw).T.astype(np.float32)  # (H*W, 9)


def _choose_tile_nc(nc: int, hw: int, itemsize: int) -> int:
    """Biggest sublane-aligned NC chunk whose double-buffered input fits a ~8 MiB budget.

    8 MiB (double-buffered input) + small P / output buffers stays well under the 16 MiB
    default scoped VMEM on v5e and the 32 MiB defaults on v6e/v7x, so no vmem_limit_bytes
    override is needed on any generation.
    """
    budget = 8 * 1024 * 1024
    max_by_vmem = max(8, budget // (2 * hw * itemsize))
    tile = min(1024, max_by_vmem)
    tile = max(8, (tile // 8) * 8)                      # sublane-aligned
    nc_ceil8 = ((nc + 7) // 8) * 8
    return min(tile, max(8, nc_ceil8))                  # never bigger than the problem


def _adaptive_pool_kernel(p_ref, x_ref, o_ref):
    # p_ref: (H*W, 9) pooling matrix (constant block, resident across the grid)
    # x_ref: (TILE_NC, H*W) lane-dense input chunk
    # o_ref: (TILE_NC, 9) output chunk
    out = jnp.dot(x_ref[...], p_ref[...], preferred_element_type=jnp.float32)
    o_ref[...] = out.astype(o_ref.dtype)


@functools.partial(jax.jit, static_argnames=("training",))
def adaptive_pooling(x: jax.Array, training: bool = True) -> jax.Array:
    """Forward pass of AdaptivePooling. x is NCHW."""
    if not training:
        # Eval branch of the PyTorch module: identity.
        return x

    n, c, h, w = x.shape
    nc = n * c
    hw = h * w

    # Lane-dense 2-D view of the input (free row-major reshape).
    x2d = x.reshape(nc, hw)

    # Kronecker pooling matrix, matched to the input dtype (f32 accumulation in-kernel).
    p = jnp.asarray(_kron_pool_matrix(h, w)).astype(x.dtype)

    tile_nc = _choose_tile_nc(nc, hw, jnp.dtype(x.dtype).itemsize)
    nc_pad = pl.cdiv(nc, tile_nc) * tile_nc
    if nc_pad != nc:
        x2d = jnp.pad(x2d, ((0, nc_pad - nc), (0, 0)))

    grid = (nc_pad // tile_nc,)

    out2d = pl.pallas_call(
        _adaptive_pool_kernel,
        out_shape=jax.ShapeDtypeStruct((nc_pad, OUT_FLAT), x.dtype),
        grid_spec=pltpu.PrefetchScalarGridSpec(
            num_scalar_prefetch=0,
            grid=grid,
            in_specs=[
                pl.BlockSpec((hw, OUT_FLAT), lambda i: (0, 0)),   # P (full, constant)
                pl.BlockSpec((tile_nc, hw), lambda i: (i, 0)),    # NC chunk
            ],
            out_specs=pl.BlockSpec((tile_nc, OUT_FLAT), lambda i: (i, 0)),
        ),
        compiler_params=pltpu.CompilerParams(
            dimension_semantics=("parallel",)),
    )(p, x2d)

    return out2d[:nc].reshape(n, c, OUT_SIZE, OUT_SIZE)


def _reference(x: np.ndarray) -> np.ndarray:
    """Pure-numpy reference of adaptive_avg_pool2d(x, 3) for NCHW input."""
    n, c, h, w = x.shape
    ph = _pool_matrix(h, OUT_SIZE)
    pw = _pool_matrix(w, OUT_SIZE)
    return np.einsum("ih,nchw,jw->ncij", ph, x, pw)


if __name__ == "__main__":
    key = jax.random.PRNGKey(0)
    x = jax.random.normal(key, (2, 4, 16, 16), dtype=jnp.float32)

    out = adaptive_pooling(x, training=True)
    out = jax.block_until_ready(out)

    ref = _reference(np.asarray(x))
    np.testing.assert_allclose(np.asarray(out), ref, rtol=1e-5, atol=1e-5)

    # A non-divisible / larger-NC shape to exercise tiling + padding paths.
    x2 = jax.random.normal(jax.random.PRNGKey(1), (3, 5, 16, 16), dtype=jnp.float32)
    out2 = jax.block_until_ready(adaptive_pooling(x2, training=True))
    np.testing.assert_allclose(np.asarray(out2), _reference(np.asarray(x2)),
                               rtol=1e-5, atol=1e-5)

    # Eval-mode (identity) branch sanity check (plain JAX passthrough).
    out_eval = jax.block_until_ready(adaptive_pooling(x, training=False))
    np.testing.assert_allclose(np.asarray(out_eval), np.asarray(x))

    print("KERNEL_OK")
</pallas_src>

<mosaic_0001>
module attributes {stable_mosaic.version = 11 : i64} {
  func.func @_adaptive_pool_kernel(%arg0: i32, %arg1: memref<256x9xf32, #tpu.memory_space<vmem>>, %arg2: memref<8x256xf32, #tpu.memory_space<vmem>>, %arg3: memref<8x9xf32, #tpu.memory_space<vmem>>) attributes {dimension_semantics = [#tpu.dimension_semantics<parallel>], iteration_bounds = array<i64: 1>, scalar_prefetch = 0 : i64, scratch_operands = 0 : i64, tpu.core_type = #tpu.core_type<tc>, window_params = [{pipeline_mode = #tpu.pipeline_mode<synchronous>, transform_indices = @transform_0, window_bounds = array<i64: 256, 9>}, {transform_indices = @transform_1, window_bounds = array<i64: 8, 256>}, {transform_indices = @transform_2, window_bounds = array<i64: 8, 9>}]} {
    %c0 = arith.constant 0 : index
    %c0_0 = arith.constant 0 : index
    %0 = vector.load %arg2[%c0, %c0_0] : memref<8x256xf32, #tpu.memory_space<vmem>>, vector<8x256xf32>
    %c0_1 = arith.constant 0 : index
    %c0_2 = arith.constant 0 : index
    %1 = vector.load %arg1[%c0_1, %c0_2] : memref<256x9xf32, #tpu.memory_space<vmem>>, vector<256x9xf32>
    %cst = arith.constant dense<0.000000e+00> : vector<8x9xf32>
    %2 = tpu.matmul %0, %1, %cst {dimension_numbers = #tpu.dot_dimension_numbers<[1], [0], [0], [1], [0, 0, 1, 1], [], []>} : vector<8x256xf32>, vector<256x9xf32>, vector<8x9xf32> -> vector<8x9xf32>
    %c0_3 = arith.constant 0 : index
    %c0_4 = arith.constant 0 : index
    %3 = vector.load %arg3[%c0_3, %c0_4] : memref<8x9xf32, #tpu.memory_space<vmem>>, vector<8x9xf32>
    tpu.vector_store %arg3[%c0_3, %c0_4], %2 {strides = array<i32>} : memref<8x9xf32, #tpu.memory_space<vmem>>, vector<8x9xf32>,
    return
  }
  func.func @transform_0(%arg0: i32) -> (i32, i32) {
    %c0_i32 = arith.constant 0 : i32
    %c0_i32_0 = arith.constant 0 : i32
    %c0_i32_1 = arith.constant 0 : i32
    return %c0_i32, %c0_i32_0 : i32, i32
  }
  func.func @transform_1(%arg0: i32) -> (i32, i32) {
    %c0_i32 = arith.constant 0 : i32
    %c0_i32_0 = arith.constant 0 : i32
    return %arg0, %c0_i32 : i32, i32
  }
  func.func @transform_2(%arg0: i32) -> (i32, i32) {
    %c0_i32 = arith.constant 0 : i32
    %c0_i32_0 = arith.constant 0 : i32
    return %arg0, %c0_i32 : i32, i32
  }
}

</mosaic_0001>

<llo_original>
// kernel: adaptive_pooling.1
$region0: #{adaptive_pooling.1}
  #allocation0 [shape = 'u32[]', space=smem, size = 0x4, offset = 0x4, fixed_abs, tag = 'smem constant byte address 0x4 - core index']
  #allocation1 [shape = 'u32[144,128]{1,0:T(1,128)}', space=vmem, size = 0x12000, scoped, tag = 'internal scratch']
  %s0 = inlined_call_operand.hbm [shape: f32[256,9], index: 0, kind: input, shape index: {}]
  %s1 = inlined_call_operand.vmem [shape: f32[8,256], index: 1, kind: input, shape index: {}]
  %s2 = inlined_call_operand.vmem [shape: f32[8,9], index: 2, kind: output, shape index: {}]
  %s3 = sld [smem:[#allocation0]]
  $region22: #{adaptive_pooling.1} parent=0
    _
  %s5 = ssub.s32 1, %s3
  %s6 = scalar_select 0, %s5, %s3
  $region1: #{adaptive_pooling.1} parent=0
    #allocation2 [shape = 'u8[131072]{0}', space=vmem, size = 0x20000, scoped, tag = 'input window, operand 0, single buffered']
    #allocation3 [shape = 's32[1]{0}', space=sflag, size = 0x4, scoped, tag = 'scoped memory for adaptive_pooling.1']
    %7 = vsyncpa [#allocation3], 0
    // Predicated region
    $region2: #{adaptive_pooling.1} parent=1 // pred_check
      _
    $region3: #{adaptive_pooling.1} parent=1 // pred_check_branch
      %9 = sbr.rel (0) target = $region5
    $region4: #{adaptive_pooling.1} parent=1 // pred_region
      %s11 = ssub.s32 4096, 4096
      %12 = vsyncadd [#allocation3], %s11
      %s13 = sshll.u32 [#allocation2], 4
      %s14 = int_to_ptr.vmem [resolvable:$true] %s13
      %19 = dma.hbm_to_vmem [thread:$0]  %s0, 4096, %s14, [#allocation3], 128, 128, 8
    $region5: #{adaptive_pooling.1} parent=1 // pred_fallthru
      _
    // Predicated region
    $region6: #{adaptive_pooling.1} parent=1 // pred_check
      _
    $region7: #{adaptive_pooling.1} parent=1 // pred_check_branch
      %21 = sbr.rel (0) target = $region9
    $region8: #{adaptive_pooling.1} parent=1 // pred_region
      _
    $region9: #{adaptive_pooling.1} parent=1 // pred_fallthru
      _
    // Predicated region
    $region10: #{adaptive_pooling.1} parent=1 // pred_check
      _
    $region11: #{adaptive_pooling.1} parent=1 // pred_check_branch
      %23 = sbr.rel (0) target = $region13
    $region12: #{adaptive_pooling.1} parent=1 // pred_region
      %24 = dma.done [#allocation3], 4096
    $region13: #{adaptive_pooling.1} parent=1 // pred_fallthru
      _
    %v25 = vld [vmem:[%s1] sm:$0xff]
    %v26 = vld [vmem:[%s1 + $0x8] sm:$0xff]
    %v27 = vld [vmem:[#allocation2] sm:$0xff]
    %v28 = vld [vmem:[#allocation2 + $0x8] sm:$0xff]
    %v29 = vld [vmem:[#allocation2 + $0x10] sm:$0xff]
    %v30 = vld [vmem:[#allocation2 + $0x18] sm:$0xff]
    %v31 = vld [vmem:[#allocation2 + $0x20] sm:$0xff]
    %v32 = vld [vmem:[#allocation2 + $0x28] sm:$0xff]
    %v33 = vld [vmem:[#allocation2 + $0x30] sm:$0xff]
    %v34 = vld [vmem:[#allocation2 + $0x38] sm:$0xff]
    %v35 = vld [vmem:[#allocation2 + $0x40] sm:$0xff]
    %v36 = vld [vmem:[#allocation2 + $0x48] sm:$0xff]
    %v37 = vld [vmem:[#allocation2 + $0x50] sm:$0xff]
    %v38 = vld [vmem:[#allocation2 + $0x58] sm:$0xff]
    %v39 = vld [vmem:[#allocation2 + $0x60] sm:$0xff]
    %v40 = vld [vmem:[#allocation2 + $0x68] sm:$0xff]
    %v41 = vld [vmem:[#allocation2 + $0x70] sm:$0xff]
    %v42 = vld [vmem:[#allocation2 + $0x78] sm:$0xff]
    %v43 = vld [vmem:[#allocation2 + $0x80] sm:$0xff]
    %v44 = vld [vmem:[#allocation2 + $0x88] sm:$0xff]
    %v45 = vld [vmem:[#allocation2 + $0x90] sm:$0xff]
    %v46 = vld [vmem:[#allocation2 + $0x98] sm:$0xff]
    %v47 = vld [vmem:[#allocation2 + $0xa0] sm:$0xff]
    %v48 = vld [vmem:[#allocation2 + $0xa8] sm:$0xff]
    %v49 = vld [vmem:[#allocation2 + $0xb0] sm:$0xff]
    %v50 = vld [vmem:[#allocation2 + $0xb8] sm:$0xff]
    %v51 = vld [vmem:[#allocation2 + $0xc0] sm:$0xff]
    %v52 = vld [vmem:[#allocation2 + $0xc8] sm:$0xff]
    %v53 = vld [vmem:[#allocation2 + $0xd0] sm:$0xff]
    %v54 = vld [vmem:[#allocation2 + $0xd8] sm:$0xff]
    %v55 = vld [vmem:[#allocation2 + $0xe0] sm:$0xff]
    %v56 = vld [vmem:[#allocation2 + $0xe8] sm:$0xff]
    %v57 = vld [vmem:[#allocation2 + $0xf0] sm:$0xff]
    %v58 = vld [vmem:[#allocation2 + $0xf8] sm:$0xff]
    %59 = vmatprep.subr.mxu0 0.0
    %60 = vmatpush1.msra.mxu0 %v42
    %61 = vmatprep.subr.mxu0 0.0
    %62 = vmatpush1.msra.mxu0 %v41
    %63 = vmatprep.subr.mxu0 0.0
    %64 = vmatpush1.msra.mxu0 %v40
    %65 = vmatprep.subr.mxu0 0.0
    %66 = vmatpush1.msra.mxu0 %v39
    %67 = vmatprep.subr.mxu0 0.0
    %68 = vmatpush1.msra.mxu0 %v38
    %69 = vmatprep.subr.mxu0 0.0
    %70 = vmatpush1.msra.mxu0 %v37
    %71 = vmatprep.subr.mxu0 0.0
    %72 = vmatpush1.msra.mxu0 %v36
    %73 = vmatprep.subr.mxu0 0.0
    %74 = vmatpush1.msra.mxu0 %v35
    %75 = vmatprep.subr.mxu0 0.0
    %76 = vmatpush1.msra.mxu0 %v34
    %77 = vmatprep.subr.mxu0 0.0
    %78 = vmatpush1.msra.mxu0 %v33
    %79 = vmatprep.subr.mxu0 0.0
    %80 = vmatpush1.msra.mxu0 %v32
    %81 = vmatprep.subr.mxu0 0.0
    %82 = vmatpush1.msra.mxu0 %v31
    %83 = vmatprep.subr.mxu0 0.0
    %84 = vmatpush1.msra.mxu0 %v30
    %85 = vmatprep.subr.mxu0 0.0
    %86 = vmatpush1.msra.mxu0 %v29
    %87 = vmatprep.subr.mxu0 0.0
    %88 = vmatpush1.msra.mxu0 %v28
    %89 = vmatprep.subr.mxu0 0.0
    %90 = vmatpush1.msra.mxu0 %v27
    %91 = vmatprep.subr.mxu0 0.0
    %92 = vmatpush2.msra.mxu0 %v58
    %93 = vmatprep.subr.mxu0 0.0
    %94 = vmatpush2.msra.mxu0 %v57
    %95 = vmatprep.subr.mxu0 0.0
    %96 = vmatpush2.msra.mxu0 %v56
    %97 = vmatprep.subr.mxu0 0.0
    %98 = vmatpush2.msra.mxu0 %v55
    %99 = vmatprep.subr.mxu0 0.0
    %100 = vmatpush2.msra.mxu0 %v54
    %101 = vmatprep.subr.mxu0 0.0
    %102 = vmatpush2.msra.mxu0 %v53
    %103 = vmatprep.subr.mxu0 0.0
    %104 = vmatpush2.msra.mxu0 %v52
    %105 = vmatprep.subr.mxu0 0.0
    %106 = vmatpush2.msra.mxu0 %v51
    %107 = vmatprep.subr.mxu0 0.0
    %108 = vmatpush2.msra.mxu0 %v50
    %109 = vmatprep.subr.mxu0 0.0
    %110 = vmatpush2.msra.mxu0 %v49
    %111 = vmatprep.subr.mxu0 0.0
    %112 = vmatpush2.msra.mxu0 %v48
    %113 = vmatprep.subr.mxu0 0.0
    %114 = vmatpush2.msra.mxu0 %v47
    %115 = vmatprep.subr.mxu0 0.0
    %116 = vmatpush2.msra.mxu0 %v46
    %117 = vmatprep.subr.mxu0 0.0
    %118 = vmatpush2.msra.mxu0 %v45
    %119 = vmatprep.subr.mxu0 0.0
    %120 = vmatpush2.msra.mxu0 %v44
    %121 = vmatprep.subr.mxu0 0.0
    %122 = vmatpush2.msra.mxu0 %v43
    %123 = vmatprep.mubr.f32.mxu0 %v26
    %124 = vmatmul.mubr.f32.gmra.mxu0 %v25
    %v125 = vpop.f32.mrf.mxu0
    %v126 = vadd.f32 0.0, %v125
    %v127 = vpop.f32.mrf.mxu0
    %128 = vdwg.mxu0
    %vm129 = vcmask 72704
    %130 = vst.msk [vmem:[%s2] sm:$0xff] %vm129, %v126
    // Predicated region
    $region14: #{adaptive_pooling.1} parent=1 // pred_check
      _
    $region15: #{adaptive_pooling.1} parent=1 // pred_check_branch
      %132 = sbr.rel (0) target = $region17
    $region16: #{adaptive_pooling.1} parent=1 // pred_region
      _
    $region17: #{adaptive_pooling.1} parent=1 // pred_fallthru
      _
    // Predicated region
    $region18: #{adaptive_pooling.1} parent=1 // pred_check
      _
    $region19: #{adaptive_pooling.1} parent=1 // pred_check_branch
      %134 = sbr.rel (0) target = $region21
    $region20: #{adaptive_pooling.1} parent=1 // pred_region
      _
    $region21: #{adaptive_pooling.1} parent=1 // pred_fallthru
      _
    %135 = vsyncpa [#allocation3], 1

</llo_original>
